<compile_context>
chip_gen: v7x
topology: tpu7x:2x2x1
jax: 0.10.0
libtpu: 0.0.40
codegen_flags: <defaults>
</compile_context>

<pallas_src>
import functools

import numpy as np

import jax
import jax.numpy as jnp
from jax.experimental import pallas as pl
from jax.experimental.pallas import tpu as pltpu


# ---------------------------------------------------------------------------
# Kernel
# ---------------------------------------------------------------------------
def _conv2d_cd_kernel(x_ref, halo_ref, mask_ref, w_ref, o_ref,
                      xh_ref, patch_ref, *, compute_dtype):
    # x_ref    : (1, Cin, TH*W)        row tile, flat spatial on lanes
    # halo_ref : (1, 1, 2, Cin, W+1)   [0|row above] and [row below|0]
    # mask_ref : (2, TH*W)             0/1 keep-masks for left/right taps
    # w_ref    : (Cout, 9*Cin)         theta-folded weight, tap-major
    # o_ref    : (1, Cout, TH*W)
    # xh_ref   : (Cin, TH*W + 2*(W+1)) scratch: haloed zero-padded flat strip
    # patch_ref: (9*Cin, TH*W)         scratch: im2col RHS
    _, cin, thw = x_ref.shape
    cout = o_ref.shape[1]
    wp1 = halo_ref.shape[-1]           # W + 1
    w_img = wp1 - 1                    # W

    # Assemble xh = [0, row_above(W), tile(TH*W), row_below(W), 0] in VMEM.
    halos = halo_ref[...].reshape(2, cin, wp1).astype(compute_dtype)
    xh_ref[:, 0:wp1] = halos[0]
    xh_ref[:, wp1:wp1 + thw] = x_ref[...].reshape(cin, thw).astype(compute_dtype)
    xh_ref[:, wp1 + thw:wp1 + thw + wp1] = halos[1]

    keep_left = mask_ref[0:1, :]       # 0 where w == 0     (kills wrap-around)
    keep_right = mask_ref[1:2, :]      # 0 where w == W - 1

    # im2col-lite: 9 shifted (+ masked) copies -> one (9*Cin, TH*W) RHS.
    for ky in range(3):
        for kx in range(3):
            tap = ky * 3 + kx
            start = ky * w_img + kx
            p = xh_ref[:, start:start + thw]
            if kx == 0:
                p = p * keep_left
            elif kx == 2:
                p = p * keep_right
            patch_ref[tap * cin:(tap + 1) * cin, :] = p

    # One large-K MXU matmul, f32 accumulation, lane-dense (Cout, TH*W) result.
    acc = jnp.dot(w_ref[...], patch_ref[...], preferred_element_type=jnp.float32)
    o_ref[...] = acc.reshape(1, cout, thw).astype(o_ref.dtype)


# ---------------------------------------------------------------------------
# Tiling / VMEM helpers
# ---------------------------------------------------------------------------
def _pick_tile_h(H, W, Cin, in_itemsize, n_batch, budget_bytes):
    """Largest divisor of H whose flat tile is lane-aligned and within budget."""
    divisors = [d for d in range(1, H + 1) if H % d == 0]
    legal = [d for d in divisors if (d * W) % 128 == 0 or d == H]
    fitting = [d for d in legal if d * W * Cin * in_itemsize <= budget_bytes]
    if not fitting:
        return min(legal)
    best = max(fitting)
    if n_batch * (H // best) < 2:              # keep both v7x TensorCores busy
        smaller = [d for d in fitting if H // d >= 2]
        if smaller:
            best = max(smaller)
    return best


def _vmem_limit_bytes(Cin, Cout, W, tile_h, in_itemsize, out_itemsize, cd_itemsize):
    thw = tile_h * W
    io = 2 * (Cin * thw * in_itemsize              # main block (double-buffered)
              + 2 * Cin * (W + 1) * in_itemsize    # halo rows
              + 2 * thw * cd_itemsize              # edge mask
              + Cout * 9 * Cin * cd_itemsize       # weights
              + Cout * thw * out_itemsize)         # output block
    scratch = Cin * (thw + 2 * (W + 1)) * cd_itemsize + 9 * Cin * thw * cd_itemsize
    acc = Cout * thw * 4
    est = int((io + scratch + acc + (1 << 20)) * 1.5)
    return int(min(max(est, 32 * 1024 * 1024), 48 * 1024 * 1024))


# ---------------------------------------------------------------------------
# Wrapper
# ---------------------------------------------------------------------------
def conv2d_cd(x_nchw, weight_oihw, theta=0.8, *, tile_h=None,
              mxu_dtype=jnp.bfloat16, input_block_budget_bytes=1 << 20):
    """Conv2d_cd forward (stride=1, padding=1, dilation=1, groups=1, no bias).

    Consumes / produces NCHW in the caller's dtype; pass mxu_dtype=jnp.float32
    for full-precision MXU operands.  theta must be a static Python number.
    """
    N, Cin, H, W = x_nchw.shape
    Cout, Cin_w, KH, KW = weight_oihw.shape
    assert (Cin_w, KH, KW) == (Cin, 3, 3), "only 3x3, groups=1 supported"

    in_dt = x_nchw.dtype
    cd = jnp.dtype(mxu_dtype)

    # Fold the central-difference term into the centre tap (tiny weight-only
    # op), then lay the weight out as (Cout, 9*Cin), tap-major / ci-minor.
    w = weight_oihw.astype(jnp.float32)
    if abs(float(theta)) >= 1e-8:
        w = w.at[:, :, 1, 1].add(-float(theta) * jnp.sum(w, axis=(2, 3)))
    w_mat = jnp.transpose(w, (0, 2, 3, 1)).reshape(Cout, 9 * Cin).astype(cd)

    if tile_h is None:
        tile_h = _pick_tile_h(H, W, Cin, in_dt.itemsize, N, input_block_budget_bytes)
    assert H % tile_h == 0, "tile_h must divide H"
    assert (tile_h * W) % 128 == 0 or tile_h == H, "flat tile must be lane-aligned"
    n_t = H // tile_h
    thw = tile_h * W

    # Free bit-reshape: NCHW with spatial flattened onto the lane axis.
    x_flat = x_nchw.reshape(N, Cin, H * W)

    # Halo rows for every tile: image row above / below (zeros at the image
    # border), each with one zero pad column so the in-kernel strip assembly is
    # a plain 3-piece copy.  Tiny gather (2 rows per tile), no full HBM pass.
    zrow = jnp.zeros((N, Cin, 1, W), in_dt)
    top_rows = jnp.concatenate(
        [zrow, x_nchw[:, :, tile_h - 1:H - 1:tile_h, :]], axis=2)      # (N,Cin,n_t,W)
    bot_rows = jnp.concatenate(
        [x_nchw[:, :, tile_h:H:tile_h, :], zrow], axis=2)              # (N,Cin,n_t,W)
    zcol = jnp.zeros((N, Cin, n_t, 1), in_dt)
    top_ext = jnp.concatenate([zcol, top_rows], axis=3)                # [0 | above]
    bot_ext = jnp.concatenate([bot_rows, zcol], axis=3)                # [below | 0]
    halos = jnp.transpose(jnp.stack([top_ext, bot_ext], axis=0),
                          (1, 3, 0, 2, 4))                             # (N,n_t,2,Cin,W+1)

    # 0/1 masks realising the W-direction zero padding (kill wrap-around of the
    # flat +-1 shifts at w == 0 / w == W-1).
    cols = np.arange(thw) % W
    edge_mask = jnp.asarray(
        np.stack([cols != 0, cols != W - 1]).astype(np.float32), dtype=cd)  # (2,THW)

    kernel = functools.partial(_conv2d_cd_kernel, compute_dtype=cd)
    out_flat = pl.pallas_call(
        kernel,
        out_shape=jax.ShapeDtypeStruct((N, Cout, H * W), in_dt),
        grid_spec=pltpu.PrefetchScalarGridSpec(
            num_scalar_prefetch=0,
            grid=(N, n_t),
            in_specs=[
                # main row tile (lane-dense flat spatial)
                pl.BlockSpec((1, Cin, thw), lambda n, t: (n, 0, t)),
                # halo rows for this tile
                pl.BlockSpec((1, 1, 2, Cin, W + 1), lambda n, t: (n, t, 0, 0, 0)),
                # edge masks: constant index map -> stay resident
                pl.BlockSpec((2, thw), lambda n, t: (0, 0)),
                # weights: constant index map -> stay resident
                pl.BlockSpec((Cout, 9 * Cin), lambda n, t: (0, 0)),
            ],
            out_specs=pl.BlockSpec((1, Cout, thw), lambda n, t: (n, 0, t)),
            scratch_shapes=[
                pltpu.VMEM((Cin, thw + 2 * (W + 1)), cd),   # haloed flat strip
                pltpu.VMEM((9 * Cin, thw), cd),             # im2col patches
            ]),
        compiler_params=pltpu.CompilerParams(
            dimension_semantics=("parallel", "parallel"),
            vmem_limit_bytes=_vmem_limit_bytes(
                Cin, Cout, W, tile_h, in_dt.itemsize, in_dt.itemsize, cd.itemsize)),
    )(x_flat, halos, edge_mask, w_mat)

    return out_flat.reshape(N, Cout, H, W)


# ---------------------------------------------------------------------------
# Pure-JAX references (for validation)
# ---------------------------------------------------------------------------
def conv2d_cd_reference(x_nchw, weight_oihw, theta):
    """Mirrors the PyTorch forward in full f32."""
    dn = ("NCHW", "OIHW", "NCHW")
    out_normal = jax.lax.conv_general_dilated(
        x_nchw, weight_oihw, window_strides=(1, 1), padding=((1, 1), (1, 1)),
        dimension_numbers=dn, precision=jax.lax.Precision.HIGHEST)
    if abs(float(theta)) < 1e-8:
        return out_normal
    kernel_diff = jnp.sum(weight_oihw, axis=(2, 3))[:, :, None, None]
    out_diff = jax.lax.conv_general_dilated(
        x_nchw, kernel_diff, window_strides=(1, 1), padding=((0, 0), (0, 0)),
        dimension_numbers=dn, precision=jax.lax.Precision.HIGHEST)
    return out_normal - theta * out_diff


def conv2d_cd_reference_quantized(x_nchw, weight_oihw, theta, mxu_dtype=jnp.bfloat16):
    """Same linear map as the kernel: theta folded in f32, operands rounded to
    the MXU dtype, accumulation in f32."""
    w = weight_oihw.astype(jnp.float32)
    if abs(float(theta)) >= 1e-8:
        w = w.at[:, :, 1, 1].add(-float(theta) * jnp.sum(w, axis=(2, 3)))
    wq = w.astype(mxu_dtype).astype(jnp.float32)
    xq = x_nchw.astype(mxu_dtype).astype(jnp.float32)
    dn = ("NCHW", "OIHW", "NCHW")
    return jax.lax.conv_general_dilated(
        xq, wq, window_strides=(1, 1), padding=((1, 1), (1, 1)),
        dimension_numbers=dn, precision=jax.lax.Precision.HIGHEST)


if __name__ == "__main__":
    key = jax.random.PRNGKey(0)
    k_x, k_w = jax.random.split(key)

    # Small shapes consistent with the module.
    N, Cin, Cout, H, W = 2, 16, 32, 16, 16
    theta = 0.8

    x = jax.random.normal(k_x, (N, Cin, H, W), jnp.float32)                 # NCHW
    weight = jax.random.normal(k_w, (Cout, Cin, 3, 3), jnp.float32) / jnp.sqrt(9.0 * Cin)

    fwd = jax.jit(functools.partial(conv2d_cd, theta=theta))
    y = fwd(x, weight)
    jax.block_until_ready(y)
    assert y.shape == (N, Cout, H, W) and y.dtype == x.dtype

    # Tight check against a reference with identical bf16 operand quantization.
    y_q = conv2d_cd_reference_quantized(x, weight, theta)
    err_q = float(jnp.max(jnp.abs(y - y_q)))
    assert err_q < 2e-3, f"quantized-ref max abs err {err_q}"

    # Loose sanity check against the full-f32 PyTorch-equivalent reference
    # (bounds the bf16 operand rounding error).
    y_ref = conv2d_cd_reference(x, weight, theta)
    err = float(jnp.max(jnp.abs(y - y_ref)))
    assert err < 2.5e-1, f"f32-ref max abs err {err}"

    print("KERNEL_OK")
</pallas_src>

<mosaic_0001>
module attributes {stable_mosaic.version = 11 : i64} {
  func.func @_conv2d_cd_kernel(%arg0: i32, %arg1: i32, %arg2: memref<1x16x256xf32, #tpu.memory_space<vmem>>, %arg3: memref<1x1x2x16x17xf32, #tpu.memory_space<vmem>>, %arg4: memref<2x256xbf16, #tpu.memory_space<vmem>>, %arg5: memref<32x144xbf16, #tpu.memory_space<vmem>>, %arg6: memref<1x32x256xf32, #tpu.memory_space<vmem>>, %arg7: memref<16x290xbf16, #tpu.memory_space<vmem>>, %arg8: memref<144x256xbf16, #tpu.memory_space<vmem>>) attributes {dimension_semantics = [#tpu.dimension_semantics<parallel>, #tpu.dimension_semantics<parallel>], iteration_bounds = array<i64: 2, 1>, scalar_prefetch = 0 : i64, scratch_operands = 2 : i64, tpu.core_type = #tpu.core_type<tc>, window_params = [{transform_indices = @transform_0, window_bounds = array<i64: 1, 16, 256>}, {transform_indices = @transform_1, window_bounds = array<i64: 1, 1, 2, 16, 17>}, {pipeline_mode = #tpu.pipeline_mode<synchronous>, transform_indices = @transform_2, window_bounds = array<i64: 2, 256>}, {pipeline_mode = #tpu.pipeline_mode<synchronous>, transform_indices = @transform_3, window_bounds = array<i64: 32, 144>}, {transform_indices = @transform_4, window_bounds = array<i64: 1, 32, 256>}]} {
    %c0 = arith.constant 0 : index
    %c0_0 = arith.constant 0 : index
    %c0_1 = arith.constant 0 : index
    %c0_2 = arith.constant 0 : index
    %c0_3 = arith.constant 0 : index
    %0 = vector.load %arg3[%c0, %c0_0, %c0_1, %c0_2, %c0_3] : memref<1x1x2x16x17xf32, #tpu.memory_space<vmem>>, vector<1x1x2x16x17xf32>
    %1 = vector.shape_cast %0 : vector<1x1x2x16x17xf32> to vector<2x16x17xf32>
    %2 = arith.truncf %1 : vector<2x16x17xf32> to vector<2x16x17xbf16>
    %3 = vector.extract_strided_slice %2 {offsets = [0, 0, 0], sizes = [1, 16, 17], strides = [1, 1, 1]} : vector<2x16x17xbf16> to vector<1x16x17xbf16>
    %4 = vector.shape_cast %3 : vector<1x16x17xbf16> to vector<16x17xbf16>
    %c0_4 = arith.constant 0 : index
    %c0_5 = arith.constant 0 : index
    %5 = vector.load %arg7[%c0_4, %c0_5] : memref<16x290xbf16, #tpu.memory_space<vmem>>, vector<16x17xbf16>
    tpu.vector_store %arg7[%c0_4, %c0_5], %4 {strides = array<i32>} : memref<16x290xbf16, #tpu.memory_space<vmem>>, vector<16x17xbf16>,
    %c0_6 = arith.constant 0 : index
    %c0_7 = arith.constant 0 : index
    %c0_8 = arith.constant 0 : index
    %6 = vector.load %arg2[%c0_6, %c0_7, %c0_8] : memref<1x16x256xf32, #tpu.memory_space<vmem>>, vector<1x16x256xf32>
    %7 = vector.shape_cast %6 : vector<1x16x256xf32> to vector<16x256xf32>
    %8 = arith.truncf %7 : vector<16x256xf32> to vector<16x256xbf16>
    %c0_9 = arith.constant 0 : index
    %c17 = arith.constant 17 : index
    %9 = vector.load %arg7[%c0_9, %c17] : memref<16x290xbf16, #tpu.memory_space<vmem>>, vector<16x256xbf16>
    tpu.vector_store %arg7[%c0_9, %c17], %8 {strides = array<i32>} : memref<16x290xbf16, #tpu.memory_space<vmem>>, vector<16x256xbf16>,
    %10 = vector.extract_strided_slice %2 {offsets = [1, 0, 0], sizes = [1, 16, 17], strides = [1, 1, 1]} : vector<2x16x17xbf16> to vector<1x16x17xbf16>
    %11 = vector.shape_cast %10 : vector<1x16x17xbf16> to vector<16x17xbf16>
    %c0_10 = arith.constant 0 : index
    %c273 = arith.constant 273 : index
    %12 = vector.load %arg7[%c0_10, %c273] : memref<16x290xbf16, #tpu.memory_space<vmem>>, vector<16x17xbf16>
    tpu.vector_store %arg7[%c0_10, %c273], %11 {strides = array<i32>} : memref<16x290xbf16, #tpu.memory_space<vmem>>, vector<16x17xbf16>,
    %c0_11 = arith.constant 0 : index
    %c0_12 = arith.constant 0 : index
    %13 = vector.load %arg4[%c0_11, %c0_12] : memref<2x256xbf16, #tpu.memory_space<vmem>>, vector<1x256xbf16>
    %c1 = arith.constant 1 : index
    %c0_13 = arith.constant 0 : index
    %14 = vector.load %arg4[%c1, %c0_13] : memref<2x256xbf16, #tpu.memory_space<vmem>>, vector<1x256xbf16>
    %c0_14 = arith.constant 0 : index
    %c0_15 = arith.constant 0 : index
    %15 = vector.load %arg7[%c0_14, %c0_15] : memref<16x290xbf16, #tpu.memory_space<vmem>>, vector<16x256xbf16>
    %16 = vector.broadcast %13 : vector<1x256xbf16> to vector<16x256xbf16>
    %17 = arith.mulf %15, %16 : vector<16x256xbf16>
    %c0_16 = arith.constant 0 : index
    %c0_17 = arith.constant 0 : index
    %18 = vector.load %arg8[%c0_16, %c0_17] : memref<144x256xbf16, #tpu.memory_space<vmem>>, vector<16x256xbf16>
    tpu.vector_store %arg8[%c0_16, %c0_17], %17 {strides = array<i32>} : memref<144x256xbf16, #tpu.memory_space<vmem>>, vector<16x256xbf16>,
    %c0_18 = arith.constant 0 : index
    %c1_19 = arith.constant 1 : index
    %19 = vector.load %arg7[%c0_18, %c1_19] : memref<16x290xbf16, #tpu.memory_space<vmem>>, vector<16x256xbf16>
    %c16 = arith.constant 16 : index
    %c0_20 = arith.constant 0 : index
    %20 = vector.load %arg8[%c16, %c0_20] : memref<144x256xbf16, #tpu.memory_space<vmem>>, vector<16x256xbf16>
    tpu.vector_store %arg8[%c16, %c0_20], %19 {strides = array<i32>} : memref<144x256xbf16, #tpu.memory_space<vmem>>, vector<16x256xbf16>,
    %c0_21 = arith.constant 0 : index
    %c2 = arith.constant 2 : index
    %21 = vector.load %arg7[%c0_21, %c2] : memref<16x290xbf16, #tpu.memory_space<vmem>>, vector<16x256xbf16>
    %22 = vector.broadcast %14 : vector<1x256xbf16> to vector<16x256xbf16>
    %23 = arith.mulf %21, %22 : vector<16x256xbf16>
    %c32 = arith.constant 32 : index
    %c0_22 = arith.constant 0 : index
    %24 = vector.load %arg8[%c32, %c0_22] : memref<144x256xbf16, #tpu.memory_space<vmem>>, vector<16x256xbf16>
    tpu.vector_store %arg8[%c32, %c0_22], %23 {strides = array<i32>} : memref<144x256xbf16, #tpu.memory_space<vmem>>, vector<16x256xbf16>,
    %c0_23 = arith.constant 0 : index
    %c16_24 = arith.constant 16 : index
    %25 = vector.load %arg7[%c0_23, %c16_24] : memref<16x290xbf16, #tpu.memory_space<vmem>>, vector<16x256xbf16>
    %26 = vector.broadcast %13 : vector<1x256xbf16> to vector<16x256xbf16>
    %27 = arith.mulf %25, %26 : vector<16x256xbf16>
    %c48 = arith.constant 48 : index
    %c0_25 = arith.constant 0 : index
    %28 = vector.load %arg8[%c48, %c0_25] : memref<144x256xbf16, #tpu.memory_space<vmem>>, vector<16x256xbf16>
    tpu.vector_store %arg8[%c48, %c0_25], %27 {strides = array<i32>} : memref<144x256xbf16, #tpu.memory_space<vmem>>, vector<16x256xbf16>,
    %c0_26 = arith.constant 0 : index
    %c17_27 = arith.constant 17 : index
    %29 = vector.load %arg7[%c0_26, %c17_27] : memref<16x290xbf16, #tpu.memory_space<vmem>>, vector<16x256xbf16>
    %c64 = arith.constant 64 : index
    %c0_28 = arith.constant 0 : index
    %30 = vector.load %arg8[%c64, %c0_28] : memref<144x256xbf16, #tpu.memory_space<vmem>>, vector<16x256xbf16>
    tpu.vector_store %arg8[%c64, %c0_28], %29 {strides = array<i32>} : memref<144x256xbf16, #tpu.memory_space<vmem>>, vector<16x256xbf16>,
    %c0_29 = arith.constant 0 : index
    %c18 = arith.constant 18 : index
    %31 = vector.load %arg7[%c0_29, %c18] : memref<16x290xbf16, #tpu.memory_space<vmem>>, vector<16x256xbf16>
    %32 = vector.broadcast %14 : vector<1x256xbf16> to vector<16x256xbf16>
    %33 = arith.mulf %31, %32 : vector<16x256xbf16>
    %c80 = arith.constant 80 : index
    %c0_30 = arith.constant 0 : index
    %34 = vector.load %arg8[%c80, %c0_30] : memref<144x256xbf16, #tpu.memory_space<vmem>>, vector<16x256xbf16>
    tpu.vector_store %arg8[%c80, %c0_30], %33 {strides = array<i32>} : memref<144x256xbf16, #tpu.memory_space<vmem>>, vector<16x256xbf16>,
    %c0_31 = arith.constant 0 : index
    %c32_32 = arith.constant 32 : index
    %35 = vector.load %arg7[%c0_31, %c32_32] : memref<16x290xbf16, #tpu.memory_space<vmem>>, vector<16x256xbf16>
    %36 = vector.broadcast %13 : vector<1x256xbf16> to vector<16x256xbf16>
    %37 = arith.mulf %35, %36 : vector<16x256xbf16>
    %c96 = arith.constant 96 : index
    %c0_33 = arith.constant 0 : index
    %38 = vector.load %arg8[%c96, %c0_33] : memref<144x256xbf16, #tpu.memory_space<vmem>>, vector<16x256xbf16>
    tpu.vector_store %arg8[%c96, %c0_33], %37 {strides = array<i32>} : memref<144x256xbf16, #tpu.memory_space<vmem>>, vector<16x256xbf16>,
    %c0_34 = arith.constant 0 : index
    %c33 = arith.constant 33 : index
    %39 = vector.load %arg7[%c0_34, %c33] : memref<16x290xbf16, #tpu.memory_space<vmem>>, vector<16x256xbf16>
    %c112 = arith.constant 112 : index
    %c0_35 = arith.constant 0 : index
    %40 = vector.load %arg8[%c112, %c0_35] : memref<144x256xbf16, #tpu.memory_space<vmem>>, vector<16x256xbf16>
    tpu.vector_store %arg8[%c112, %c0_35], %39 {strides = array<i32>} : memref<144x256xbf16, #tpu.memory_space<vmem>>, vector<16x256xbf16>,
    %c0_36 = arith.constant 0 : index
    %c34 = arith.constant 34 : index
    %41 = vector.load %arg7[%c0_36, %c34] : memref<16x290xbf16, #tpu.memory_space<vmem>>, vector<16x256xbf16>
    %42 = vector.broadcast %14 : vector<1x256xbf16> to vector<16x256xbf16>
    %43 = arith.mulf %41, %42 : vector<16x256xbf16>
    %c128 = arith.constant 128 : index
    %c0_37 = arith.constant 0 : index
    %44 = vector.load %arg8[%c128, %c0_37] : memref<144x256xbf16, #tpu.memory_space<vmem>>, vector<16x256xbf16>
    tpu.vector_store %arg8[%c128, %c0_37], %43 {strides = array<i32>} : memref<144x256xbf16, #tpu.memory_space<vmem>>, vector<16x256xbf16>,
    %c0_38 = arith.constant 0 : index
    %c0_39 = arith.constant 0 : index
    %45 = vector.load %arg5[%c0_38, %c0_39] : memref<32x144xbf16, #tpu.memory_space<vmem>>, vector<32x144xbf16>
    %c0_40 = arith.constant 0 : index
    %c0_41 = arith.constant 0 : index
    %46 = vector.load %arg8[%c0_40, %c0_41] : memref<144x256xbf16, #tpu.memory_space<vmem>>, vector<144x256xbf16>
    %cst = arith.constant dense<0.000000e+00> : vector<32x256xf32>
    %47 = tpu.matmul %45, %46, %cst {dimension_numbers = #tpu.dot_dimension_numbers<[1], [0], [0], [1], [0, 0, 1, 1], [], []>} : vector<32x144xbf16>, vector<144x256xbf16>, vector<32x256xf32> -> vector<32x256xf32>
    %48 = vector.shape_cast %47 : vector<32x256xf32> to vector<1x32x256xf32>
    %c0_42 = arith.constant 0 : index
    %c0_43 = arith.constant 0 : index
    %c0_44 = arith.constant 0 : index
    %49 = vector.load %arg6[%c0_42, %c0_43, %c0_44] : memref<1x32x256xf32, #tpu.memory_space<vmem>>, vector<1x32x256xf32>
    tpu.vector_store %arg6[%c0_42, %c0_43, %c0_44], %48 {strides = array<i32>} : memref<1x32x256xf32, #tpu.memory_space<vmem>>, vector<1x32x256xf32>,
    return
  }
  func.func @transform_0(%arg0: i32, %arg1: i32) -> (i32, i32, i32) {
    %c0_i32 = arith.constant 0 : i32
    %c0_i32_0 = arith.constant 0 : i32
    return %arg0, %c0_i32, %arg1 : i32, i32, i32
  }
  func.func @transform_1(%arg0: i32, %arg1: i32) -> (i32, i32, i32, i32, i32) {
    %c0_i32 = arith.constant 0 : i32
    %c0_i32_0 = arith.constant 0 : i32
    %c0_i32_1 = arith.constant 0 : i32
    %c0_i32_2 = arith.constant 0 : i32
    return %arg0, %arg1, %c0_i32, %c0_i32_0, %c0_i32_1 : i32, i32, i32, i32, i32
  }
  func.func @transform_2(%arg0: i32, %arg1: i32) -> (i32, i32) {
    %c0_i32 = arith.constant 0 : i32
    %c0_i32_0 = arith.constant 0 : i32
    %c0_i32_1 = arith.constant 0 : i32
    return %c0_i32, %c0_i32_0 : i32, i32
  }
  func.func @transform_3(%arg0: i32, %arg1: i32) -> (i32, i32) {
    %c0_i32 = arith.constant 0 : i32
    %c0_i32_0 = arith.constant 0 : i32
    %c0_i32_1 = arith.constant 0 : i32
    return %c0_i32, %c0_i32_0 : i32, i32
  }
  func.func @transform_4(%arg0: i32, %arg1: i32) -> (i32, i32, i32) {
    %c0_i32 = arith.constant 0 : i32
    %c0_i32_0 = arith.constant 0 : i32
    return %arg0, %c0_i32, %arg1 : i32, i32, i32
  }
}

</mosaic_0001>

<llo_original>
// kernel: conv2d_cd.1
$region0: #{conv2d_cd.1}
  #allocation0 [shape = 'u32[]', space=smem, size = 0x4, offset = 0x4, fixed_abs, tag = 'smem constant byte address 0x4 - core index']
  #allocation1 [shape = 'u32[144,128]{1,0:T(1,128)}', space=vmem, size = 0x12000, scoped, tag = 'internal scratch']
  #allocation2 [shape = 'bf16[16,290]{1,0:T(16,128)(2,1)}', space=vmem, size = 0x3000, scoped, tag = 'scratch operand']
  #allocation3 [shape = 'bf16[144,256]{1,0:T(16,128)(2,1)}', space=vmem, size = 0x12000, scoped, tag = 'scratch operand']
  %s0 = inlined_call_operand.vmem [shape: f32[2,16,256], index: 0, kind: input, shape index: {}]
  %s1 = inlined_call_operand.vmem [shape: f32[2,1,2,16,17], index: 1, kind: input, shape index: {}]
  %s2 = inlined_call_operand.vmem [shape: bf16[2,256], index: 2, kind: input, shape index: {}]
  %s3 = inlined_call_operand.vmem [shape: bf16[32,144], index: 3, kind: input, shape index: {}]
  %s4 = inlined_call_operand.vmem [shape: f32[2,32,256], index: 4, kind: output, shape index: {}]
  %s5 = sld [smem:[#allocation0]]
  $region49: #{conv2d_cd.1} parent=0
    _
  %s7 = ssub.s32 1, %s5
  %s8 = scalar_select 0, %s7, %s5
  loop: start=0, step=1, limit=4
  $region2: #{conv2d_cd.1} parent=0 // loop_pre_header
    _
  $region3: #{conv2d_cd.1} parent=0 // loop_header
    %s10 = sphi 0, %s14
    %p11 = scmp.ge.s32.totalorder %s10, 4
    %s17 = sphi 0, %s29
    %s18 = sphi 0, %s25
    %s19 = sphi 0, %s17
    %s20 = sphi 0, %s18
    %s21 = sphi 0, %s19
    %s22 = sphi 0, %s20
    %s34 = sphi 0, %s36
    %s37 = sphi 0, %s34
    %s38 = sphi 0, %s37
    %s54 = sphi 0, %s38
    %s62 = sphi 0, %s64
    %s65 = sphi 0, %s62
    %s66 = sphi 0, %s65
    %s82 = sphi 0, %s66
    %s86 = sphi 0, %s86
    %s88 = sphi 0, %s86
    %s89 = sphi 0, %s88
    %s103 = sphi 0, %s89
    %s107 = sphi 0, %s107
    %s109 = sphi 0, %s107
    %s110 = sphi 0, %s109
    %s124 = sphi 0, %s110
    %s132 = sphi 0, %s134
    %s135 = sphi 0, %s132
    %s136 = sphi 0, %s135
    %s152 = sphi 0, %s136
  $region4: #{conv2d_cd.1} parent=0 // loop_header_branch
    %13 = sbr.rel (%p11) target = $region8
  $region5: #{conv2d_cd.1} parent=0 // loop_body
    %s15 = ssub.s32 %s10, 1
    %s16 = ssub.s32 %s10, 2
    %s23 = sadd.s32 1, %s18
    %p24 = scmp.ge.s32.totalorder %s23, 1
    %s25 = scalar_select %p24, 0, %s23
    %s26 = sadd.s32 1, %s17
    %s27 = scalar_select %p24, %s26, %s17
    %p28 = scmp.ge.s32.totalorder %s27, 2
    %s29 = scalar_select %p28, 0, %s27
    %s30 = ssub.s32 %s17, %s29
    %s31 = ssub.s32 %s18, %s25
    %s32 = sor.u32 %s30, %s31
    %p33 = scmp.eq.s32.totalorder %s32, 0
    %s35 = sadd.s32 %s34, 1
    %s36 = scalar_select %p33, %s34, %s35
    %p39 = pneg %p33
    %p40 = scmp.eq.s32.totalorder %s10, 1
    %p41 = por %p39, %p40
    %p42 = scmp.ne.s32.totalorder %s34, %s37
    %p43 = scmp.eq.s32.totalorder %s10, 0
    %p44 = por %p42, %p43
    %p45 = scmp.ne.s32.totalorder %s34, %s37
    %p46 = scmp.eq.s32.totalorder %s15, 1
    %p47 = por %p45, %p46
    %p48 = scmp.ne.s32.totalorder %s37, %s38
    %p49 = scmp.eq.s32.totalorder %s15, 0
    %p50 = por %p48, %p49
    %p51 = scmp.ne.s32.totalorder %s37, %s38
    %p52 = scmp.eq.s32.totalorder %s16, 1
    %p53 = por %p51, %p52
    %p55 = scmp.ne.s32.totalorder %s38, %s54
    %p56 = scmp.eq.s32.totalorder %s16, 0
    %p57 = por %p55, %p56
    %s58 = ssub.s32 %s17, %s29
    %s59 = ssub.s32 %s18, %s25
    %s60 = sor.u32 %s58, %s59
    %p61 = scmp.eq.s32.totalorder %s60, 0
    %s63 = sadd.s32 %s62, 1
    %s64 = scalar_select %p61, %s62, %s63
    %p67 = pneg %p61
    %p68 = scmp.eq.s32.totalorder %s10, 1
    %p69 = por %p67, %p68
    %p70 = scmp.ne.s32.totalorder %s62, %s65
    %p71 = scmp.eq.s32.totalorder %s10, 0
    %p72 = por %p70, %p71
    %p73 = scmp.ne.s32.totalorder %s62, %s65
    %p74 = scmp.eq.s32.totalorder %s15, 1
    %p75 = por %p73, %p74
    %p76 = scmp.ne.s32.totalorder %s65, %s66
    %p77 = scmp.eq.s32.totalorder %s15, 0
    %p78 = por %p76, %p77
    %p79 = scmp.ne.s32.totalorder %s65, %s66
    %p80 = scmp.eq.s32.totalorder %s16, 1
    %p81 = por %p79, %p80
    %p83 = scmp.ne.s32.totalorder %s66, %s82
    %p84 = scmp.eq.s32.totalorder %s16, 0
    %p85 = por %p83, %p84
    %s87 = sadd.s32 %s86, 1
    %p90 = scmp.eq.s32.totalorder %s10, 1
    %p91 = scmp.ne.s32.totalorder %s86, %s88
    %p92 = scmp.eq.s32.totalorder %s10, 0
    %p93 = por %p91, %p92
    %p94 = scmp.ne.s32.totalorder %s86, %s88
    %p95 = scmp.eq.s32.totalorder %s15, 1
    %p96 = por %p94, %p95
    %p97 = scmp.ne.s32.totalorder %s88, %s89
    %p98 = scmp.eq.s32.totalorder %s15, 0
    %p99 = por %p97, %p98
    %p100 = scmp.ne.s32.totalorder %s88, %s89
    %p101 = scmp.eq.s32.totalorder %s16, 1
    %p102 = por %p100, %p101
    %p104 = scmp.ne.s32.totalorder %s89, %s103
    %p105 = scmp.eq.s32.totalorder %s16, 0
    %p106 = por %p104, %p105
    %s108 = sadd.s32 %s107, 1
    %p111 = scmp.eq.s32.totalorder %s10, 1
    %p112 = scmp.ne.s32.totalorder %s107, %s109
    %p113 = scmp.eq.s32.totalorder %s10, 0
    %p114 = por %p112, %p113
    %p115 = scmp.ne.s32.totalorder %s107, %s109
    %p116 = scmp.eq.s32.totalorder %s15, 1
    %p117 = por %p115, %p116
    %p118 = scmp.ne.s32.totalorder %s109, %s110
    %p119 = scmp.eq.s32.totalorder %s15, 0
    %p120 = por %p118, %p119
    %p121 = scmp.ne.s32.totalorder %s109, %s110
    %p122 = scmp.eq.s32.totalorder %s16, 1
    %p123 = por %p121, %p122
    %p125 = scmp.ne.s32.totalorder %s110, %s124
    %p126 = scmp.eq.s32.totalorder %s16, 0
    %p127 = por %p125, %p126
    %s128 = ssub.s32 %s17, %s29
    %s129 = ssub.s32 %s18, %s25
    %s130 = sor.u32 %s128, %s129
    %p131 = scmp.eq.s32.totalorder %s130, 0
    %s133 = sadd.s32 %s132, 1
    %s134 = scalar_select %p131, %s132, %s133
    %p137 = pneg %p131
    %p138 = scmp.eq.s32.totalorder %s10, 1
    %p139 = por %p137, %p138
    %p140 = scmp.ne.s32.totalorder %s132, %s135
    %p141 = scmp.eq.s32.totalorder %s10, 0
    %p142 = por %p140, %p141
    %p143 = scmp.ne.s32.totalorder %s132, %s135
    %p144 = scmp.eq.s32.totalorder %s15, 1
    %p145 = por %p143, %p144
    %p146 = scmp.ne.s32.totalorder %s135, %s136
    %p147 = scmp.eq.s32.totalorder %s15, 0
    %p148 = por %p146, %p147
    %p149 = scmp.ne.s32.totalorder %s135, %s136
    %p150 = scmp.eq.s32.totalorder %s16, 1
    %p151 = por %p149, %p150
    %p153 = scmp.ne.s32.totalorder %s136, %s152
    %p154 = scmp.eq.s32.totalorder %s16, 0
    %p155 = por %p153, %p154
    %p156 = scmp.le.s32.totalorder 1, %s10
    %p157 = scmp.lt.s32.totalorder %s10, 3
    %p158 = pnand %p156, %p157
    %p159 = pneg %p158
    // Predicated region
    $region9: #{conv2d_cd.1} parent=5 // pred_check
      _
    $region10: #{conv2d_cd.1} parent=5 // pred_check_branch
      %161 = sbr.rel (%p158) target = $region12
    $region11: #{conv2d_cd.1} parent=5 // pred_region
      %s162 = ssub.s32 %s10, 1
      // Predicated region
      $region13: #{conv2d_cd.1} parent=11 // pred_check
        %p163 = pneg %p99
      $region14: #{conv2d_cd.1} parent=11 // pred_check_branch
        %165 = sbr.rel (%p163) target = $region16
      $region15: #{conv2d_cd.1} parent=11 // pred_region
        _
      $region16: #{conv2d_cd.1} parent=11 // pred_fallthru
        _
      // Predicated region
      $region17: #{conv2d_cd.1} parent=11 // pred_check
        %p166 = pneg %p120
      $region18: #{conv2d_cd.1} parent=11 // pred_check_branch
        %168 = sbr.rel (%p166) target = $region20
      $region19: #{conv2d_cd.1} parent=11 // pred_region
        _
      $region20: #{conv2d_cd.1} parent=11 // pred_fallthru
        _
    $region12: #{conv2d_cd.1} parent=5 // pred_fallthru
      _
    %p169 = scmp.lt.s32.totalorder %s10, 2
    // Predicated region
    $region21: #{conv2d_cd.1} parent=5 // pred_check
      %p170 = pneg %p169
    $region22: #{conv2d_cd.1} parent=5 // pred_check_branch
      %172 = sbr.rel (%p170) target = $region24
    $region23: #{conv2d_cd.1} parent=5 // pred_region
      // Predicated region
      $region25: #{conv2d_cd.1} parent=23 // pred_check
        %p173 = pneg %p44
      $region26: #{conv2d_cd.1} parent=23 // pred_check_branch
        %175 = sbr.rel (%p173) target = $region28
      $region27: #{conv2d_cd.1} parent=23 // pred_region
        %s176 = smul.u32 2, %s18
        %p177 = scmp.lt.s32.totalorder %s17, 1
        %s178 = scalar_select %p177, %s17, 1
        %p179 = scmp.lt.s32.totalorder %s176, 1
        %s180 = scalar_select %p179, %s176, 1
        %s181 = smul.addr %s178, 4
        %s182 = sadd.s32 %s180, %s181
        %s183 = smul.addr %s182, 8
        %s184 = scalar_lea.vmem %s0, %s183
        %s185 = smul.u32 2, %s18
      $region28: #{conv2d_cd.1} parent=23 // pred_fallthru
        _
      // Predicated region
      $region29: #{conv2d_cd.1} parent=23 // pred_check
        %p186 = pneg %p72
      $region30: #{conv2d_cd.1} parent=23 // pred_check_branch
        %188 = sbr.rel (%p186) target = $region32
      $region31: #{conv2d_cd.1} parent=23 // pred_region
        %p189 = scmp.lt.s32.totalorder %s17, 1
        %s190 = scalar_select %p189, %s17, 1
        %p191 = scmp.lt.s32.totalorder %s18, 0
        %s192 = scalar_select %p191, %s18, 0
        %s193 = smul.addr %s192, 4
        %s194 = smul.addr %s190, 4
        %s195 = sadd.s32 %s193, %s194
        %s196 = smul.addr %s195, 8
        %s197 = scalar_lea.vmem %s1, %s196
      $region32: #{conv2d_cd.1} parent=23 // pred_fallthru
        _
    $region24: #{conv2d_cd.1} parent=5 // pred_fallthru
      _
    %p198 = scmp.le.s32.totalorder 1, %s10
    %p199 = scmp.lt.s32.totalorder %s10, 3
    %p200 = pnand %p198, %p199
    %p201 = pneg %p200
    // Predicated region
    $region33: #{conv2d_cd.1} parent=5 // pred_check
      _
    $region34: #{conv2d_cd.1} parent=5 // pred_check_branch
      %203 = sbr.rel (%p200) target = $region36
    $region35: #{conv2d_cd.1} parent=5 // pred_region
      %s204 = ssub.s32 %s10, 1
      %s205 = smul.u32 2, %s20
      %p206 = scmp.lt.s32.totalorder %s19, 1
      %s207 = scalar_select %p206, %s19, 1
      %p208 = scmp.lt.s32.totalorder %s205, 1
      %s209 = scalar_select %p208, %s205, 1
      %s210 = smul.addr %s207, 4
      %s211 = sadd.s32 %s209, %s210
      %s212 = smul.addr %s211, 8
      %s213 = scalar_lea.vmem %s0, %s212
      %p214 = pneg %p50
      %p215 = pneg %p47
      %p216 = scmp.lt.s32.totalorder %s19, 1
      %s217 = scalar_select %p216, %s19, 1
      %p218 = scmp.lt.s32.totalorder %s20, 0
      %s219 = scalar_select %p218, %s20, 0
      %s220 = smul.addr %s219, 4
      %s221 = smul.addr %s217, 4
      %s222 = sadd.s32 %s220, %s221
      %s223 = smul.addr %s222, 8
      %s224 = scalar_lea.vmem %s1, %s223
      %p225 = pneg %p78
      %p226 = pneg %p75
      %p227 = pneg %p99
      %p228 = pneg %p96
      %p229 = pneg %p120
      %p230 = pneg %p117
      %p231 = pneg %p148
      %p232 = pneg %p145
      %s233 = smul.u32 2, %s20
      %p234 = scmp.lt.s32.totalorder %s19, 1
      %s235 = scalar_select %p234, %s19, 1
      %p236 = scmp.lt.s32.totalorder %s233, 1
      %s237 = scalar_select %p236, %s233, 1
      %s238 = smul.addr %s235, 8
      %s239 = sadd.s32 %s237, %s238
      %s240 = smul.addr %s239, 8
      %s241 = scalar_lea.vmem %s4, %s240
      %s242 = smul.u32 2, %s20
      %p243 = scmp.lt.s32.totalorder %s19, 1
      %s244 = scalar_select %p243, %s19, 1
      %p245 = scmp.lt.s32.totalorder %s242, 1
      %s246 = scalar_select %p245, %s242, 1
      %s247 = smul.addr %s244, 4
      %s248 = sadd.s32 %s246, %s247
      %s249 = smul.addr %s248, 8
      %s250 = scalar_lea.vmem %s0, %s249
      %s251 = smul.u32 2, %s20
      %p252 = scmp.lt.s32.totalorder %s19, 1
      %s253 = scalar_select %p252, %s19, 1
      %p254 = scmp.lt.s32.totalorder %s20, 0
      %s255 = scalar_select %p254, %s20, 0
      %s256 = smul.addr %s255, 4
      %s257 = smul.addr %s253, 4
      %s258 = sadd.s32 %s256, %s257
      %s259 = smul.addr %s258, 8
      %s260 = scalar_lea.vmem %s1, %s259
      %s261 = smul.u32 2, %s20
      %p262 = scmp.lt.s32.totalorder %s19, 1
      %s263 = scalar_select %p262, %s19, 1
      %p264 = scmp.lt.s32.totalorder %s261, 1
      %s265 = scalar_select %p264, %s261, 1
      %s266 = smul.addr %s263, 8
      %s267 = sadd.s32 %s265, %s266
      %s268 = smul.addr %s267, 8
      %s269 = scalar_lea.vmem %s4, %s268
      %s270 = smul.u32 2, %s20
      %v272 = vld [vmem:[%s260] sm:$0xff]
      %v273 = vld [vmem:[%s260 + $0x8] sm:$0xff]
      %v274 = vld [vmem:[%s260 + $0x10] sm:$0xff]
      %v275 = vld [vmem:[%s260 + $0x18] sm:$0xff]
      %v276 = vpack.c.bf16 %v273, %v272
      %v277 = vpack.c.bf16 %v275, %v274
      %vm278 = vcmask 138240
      %279 = vst.msk [vmem:[#allocation2] sm:$0xff] %vm278, %v276
      %v280 = vld [vmem:[%s250] sm:$0xff]
      %v281 = vld [vmem:[%s250 + $0x8] sm:$0xff]
      %v282 = vld [vmem:[%s250 + $0x10] sm:$0xff]
      %v283 = vld [vmem:[%s250 + $0x18] sm:$0xff]
      %v284 = vpack.c.bf16 %v282, %v280
      %v285 = vpack.c.bf16 %v283, %v281
      %288 = vrot.lane.b32.xlu0 %v284, 17
      %v289 = vpop.permute.xlu0 %288
      %290 = vrot.lane.b32.xlu0 %v285, 17
      %v291 = vpop.permute.xlu0 %290
      %vm292 = vcmask 138240
      %v293 = vsel %vm292, %v289, %v291
      %vm297 = vcmask 1047688
      %298 = vst.msk [vmem:[#allocation2] sm:$0xff] %vm297, %v289
      %299 = vst [vmem:[#allocation2 + $0x8] sm:$0xff] %v293
      %300 = vst.msk [vmem:[#allocation2 + $0x10] sm:$0xff] %vm278, %v291
      %302 = vrot.lane.b32.xlu0 %v277, 17
      %v303 = vpop.permute.xlu0 %302
      %vm305 = vcmask 277640
      %306 = vst.msk [vmem:[#allocation2 + $0x10] sm:$0xff] %vm305, %v303
      %v307 = vld [vmem:[%s2] sm:$0x3]
      %v308 = vld [vmem:[#allocation2] sm:$0xff]
      %v309 = vld [vmem:[#allocation2 + $0x8] sm:$0xff]
      %v312 = vunpack.c.l.s4 1966171168
      %v313 = vunpack.c.0.s8 %v312
      %v314 = vlaneseq
      %v315 = vshrl.u32 %v314, 7
      %v316 = vsub.s32 %v313, %v315
      %v317 = vrot.slane %v307, %v316
      %v318 = vcombine.high %v317, %v317
      %v320 = vunpack.c.l.s4 1966171168
      %v321 = vunpack.c.0.s8 %v320
      %v322 = vlaneseq
      %v323 = vshrl.u32 %v322, 7
      %v324 = vsub.s32 %v321, %v323
      %v325 = vrot.slane %v317, %v324
      %v327 = vunpack.c.l.s4 1966171168
      %v328 = vunpack.c.0.s8 %v327
      %v329 = vlaneseq
      %v330 = vshrl.u32 %v329, 7
      %v331 = vsub.s32 %v328, %v330
      %v332 = vrot.slane %v318, %v331
      %v334 = vpack.i.b16 %v325, %v325
      %v336 = vlaneseq
      %v337 = vshrl.u32 %v336, 7
      %v338 = vsub.s32 0, %v337
      %v339 = vrot.slane %v334, %v338
      %v341 = vpack.i.b16 %v332, %v332
      %v343 = vlaneseq
      %v344 = vshrl.u32 %v343, 7
      %v345 = vsub.s32 0, %v344
      %v346 = vrot.slane %v341, %v345
      %v347 = vmul.bf16 %v308, %v339
      %v348 = vmul.bf16 %v309, %v346
      %349 = vst [vmem:[#allocation3] sm:$0xff] %v347
      %350 = vst [vmem:[#allocation3 + $0x8] sm:$0xff] %v348
      %v351 = vld [vmem:[#allocation2] sm:$0xff]
      %v352 = vld [vmem:[#allocation2 + $0x8] sm:$0xff]
      %v353 = vld [vmem:[#allocation2 + $0x10] sm:$0xff]
      %357 = vrot.lane.b32.xlu0 %v351, 127
      %v358 = vpop.permute.xlu0 %357
      %359 = vrot.lane.b32.xlu0 %v352, 127
      %v360 = vpop.permute.xlu0 %359
      %361 = vrot.lane.b32.xlu0 %v353, 127
      %v362 = vpop.permute.xlu0 %361
      %vm363 = vcmask 1039360
      %v364 = vsel %vm363, %v358, %v360
      %v365 = vsel %vm363, %v360, %v362
      %368 = vst [vmem:[#allocation3 + $0x10] sm:$0xff] %v364
      %369 = vst [vmem:[#allocation3 + $0x18] sm:$0xff] %v365
      %v370 = vld [vmem:[#allocation2] sm:$0xff]
      %v371 = vld [vmem:[#allocation2 + $0x8] sm:$0xff]
      %v372 = vld [vmem:[#allocation2 + $0x10] sm:$0xff]
      %v373 = vshrl.u32 %v325, 16
      %v374 = vpack.i.b16 %v373, %v373
      %v376 = vlaneseq
      %v377 = vshrl.u32 %v376, 7
      %v378 = vsub.s32 0, %v377
      %v379 = vrot.slane %v374, %v378
      %v380 = vshrl.u32 %v332, 16
      %v381 = vpack.i.b16 %v380, %v380
      %v383 = vlaneseq
      %v384 = vshrl.u32 %v383, 7
      %v385 = vsub.s32 0, %v384
      %v386 = vrot.slane %v381, %v385
      %389 = vrot.lane.b32.xlu0 %v379, 2
      %v390 = vpop.permute.xlu0 %389
      %391 = vrot.lane.b32.xlu0 %v386, 2
      %v392 = vpop.permute.xlu0 %391
      %vm393 = vcmask 15360
      %v394 = vsel %vm393, %v390, %v392
      %v398 = vmul.bf16 %v370, %v390
      %v399 = vmul.bf16 %v371, %v394
      %v400 = vmul.bf16 %v372, %v392
      %404 = vrot.lane.b32.xlu0 %v398, 126
      %v405 = vpop.permute.xlu0 %404
      %406 = vrot.lane.b32.xlu0 %v399, 126
      %v407 = vpop.permute.xlu0 %406
      %408 = vrot.lane.b32.xlu0 %v400, 126
      %v409 = vpop.permute.xlu0 %408
      %vm410 = vcmask 1031168
      %v411 = vsel %vm410, %v405, %v407
      %v412 = vsel %vm410, %v407, %v409
      %415 = vst [vmem:[#allocation3 + $0x20] sm:$0xff] %v411
      %416 = vst [vmem:[#allocation3 + $0x28] sm:$0xff] %v412
      %v417 = vld [vmem:[#allocation2] sm:$0xff]
      %v418 = vld [vmem:[#allocation2 + $0x8] sm:$0xff]
      %v419 = vld [vmem:[#allocation2 + $0x10] sm:$0xff]
      %422 = vrot.lane.b32.xlu0 %v339, 16
      %v423 = vpop.permute.xlu0 %422
      %424 = vrot.lane.b32.xlu0 %v346, 16
      %v425 = vpop.permute.xlu0 %424
      %vm426 = vcmask 130048
      %v427 = vsel %vm426, %v423, %v425
      %v431 = vmul.bf16 %v417, %v423
      %v432 = vmul.bf16 %v418, %v427
      %v433 = vmul.bf16 %v419, %v425
      %437 = vrot.lane.b32.xlu0 %v431, 112
      %v438 = vpop.permute.xlu0 %437
      %439 = vrot.lane.b32.xlu0 %v432, 112
      %v440 = vpop.permute.xlu0 %439
      %441 = vrot.lane.b32.xlu0 %v433, 112
      %v442 = vpop.permute.xlu0 %441
      %vm443 = vcmask 916480
      %v444 = vsel %vm443, %v438, %v440
      %v445 = vsel %vm443, %v440, %v442
      %448 = vst [vmem:[#allocation3 + $0x30] sm:$0xff] %v444
      %449 = vst [vmem:[#allocation3 + $0x38] sm:$0xff] %v445
      %v450 = vld [vmem:[#allocation2] sm:$0xff]
      %v451 = vld [vmem:[#allocation2 + $0x8] sm:$0xff]
      %v452 = vld [vmem:[#allocation2 + $0x10] sm:$0xff]
      %456 = vrot.lane.b32.xlu0 %v450, 111
      %v457 = vpop.permute.xlu0 %456
      %458 = vrot.lane.b32.xlu0 %v451, 111
      %v459 = vpop.permute.xlu0 %458
      %460 = vrot.lane.b32.xlu0 %v452, 111
      %v461 = vpop.permute.xlu0 %460
      %vm462 = vcmask 908288
      %v463 = vsel %vm462, %v457, %v459
      %v464 = vsel %vm462, %v459, %v461
      %467 = vst [vmem:[#allocation3 + $0x40] sm:$0xff] %v463
      %468 = vst [vmem:[#allocation3 + $0x48] sm:$0xff] %v464
      %v469 = vld [vmem:[#allocation2] sm:$0xff]
      %v470 = vld [vmem:[#allocation2 + $0x8] sm:$0xff]
      %v471 = vld [vmem:[#allocation2 + $0x10] sm:$0xff]
      %472 = vrot.lane.b32.xlu0 %v379, 18
      %v473 = vpop.permute.xlu0 %472
      %474 = vrot.lane.b32.xlu0 %v386, 18
      %v475 = vpop.permute.xlu0 %474
      %vm476 = vcmask 146432
      %v477 = vsel %vm476, %v473, %v475
      %v481 = vmul.bf16 %v469, %v473
      %v482 = vmul.bf16 %v470, %v477
      %v483 = vmul.bf16 %v471, %v475
      %487 = vrot.lane.b32.xlu0 %v481, 110
      %v488 = vpop.permute.xlu0 %487
      %489 = vrot.lane.b32.xlu0 %v482, 110
      %v490 = vpop.permute.xlu0 %489
      %491 = vrot.lane.b32.xlu0 %v483, 110
      %v492 = vpop.permute.xlu0 %491
      %vm493 = vcmask 900096
      %v494 = vsel %vm493, %v488, %v490
      %v495 = vsel %vm493, %v490, %v492
      %498 = vst [vmem:[#allocation3 + $0x50] sm:$0xff] %v494
      %499 = vst [vmem:[#allocation3 + $0x58] sm:$0xff] %v495
      %v500 = vld [vmem:[#allocation2] sm:$0xff]
      %v501 = vld [vmem:[#allocation2 + $0x8] sm:$0xff]
      %v502 = vld [vmem:[#allocation2 + $0x10] sm:$0xff]
      %503 = vrot.lane.b32.xlu0 %v339, 32
      %v504 = vpop.permute.xlu0 %503
      %505 = vrot.lane.b32.xlu0 %v346, 32
      %v506 = vpop.permute.xlu0 %505
      %vm507 = vcmask 261120
      %v508 = vsel %vm507, %v504, %v506
      %v512 = vmul.bf16 %v500, %v504
      %v513 = vmul.bf16 %v501, %v508
      %v514 = vmul.bf16 %v502, %v506
      %518 = vrot.lane.b32.xlu0 %v512, 96
      %v519 = vpop.permute.xlu0 %518
      %520 = vrot.lane.b32.xlu0 %v513, 96
      %v521 = vpop.permute.xlu0 %520
      %522 = vrot.lane.b32.xlu0 %v514, 96
      %v523 = vpop.permute.xlu0 %522
      %vm524 = vcmask 785408
      %v525 = vsel %vm524, %v519, %v521
      %v526 = vsel %vm524, %v521, %v523
      %529 = vst [vmem:[#allocation3 + $0x60] sm:$0xff] %v525
      %530 = vst [vmem:[#allocation3 + $0x68] sm:$0xff] %v526
      %v531 = vld [vmem:[#allocation2] sm:$0xff]
      %v532 = vld [vmem:[#allocation2 + $0x8] sm:$0xff]
      %v533 = vld [vmem:[#allocation2 + $0x10] sm:$0xff]
      %537 = vrot.lane.b32.xlu0 %v531, 95
      %v538 = vpop.permute.xlu0 %537
      %539 = vrot.lane.b32.xlu0 %v532, 95
      %v540 = vpop.permute.xlu0 %539
      %541 = vrot.lane.b32.xlu0 %v533, 95
      %v542 = vpop.permute.xlu0 %541
      %vm543 = vcmask 777216
      %v544 = vsel %vm543, %v538, %v540
      %v545 = vsel %vm543, %v540, %v542
      %548 = vst [vmem:[#allocation3 + $0x70] sm:$0xff] %v544
      %549 = vst [vmem:[#allocation3 + $0x78] sm:$0xff] %v545
      %v550 = vld [vmem:[#allocation2] sm:$0xff]
      %v551 = vld [vmem:[#allocation2 + $0x8] sm:$0xff]
      %v552 = vld [vmem:[#allocation2 + $0x10] sm:$0xff]
      %553 = vrot.lane.b32.xlu0 %v379, 34
      %v554 = vpop.permute.xlu0 %553
      %555 = vrot.lane.b32.xlu0 %v386, 34
      %v556 = vpop.permute.xlu0 %555
      %vm557 = vcmask 277504
      %v558 = vsel %vm557, %v554, %v556
      %v562 = vmul.bf16 %v550, %v554
      %v563 = vmul.bf16 %v551, %v558
      %v564 = vmul.bf16 %v552, %v556
      %568 = vrot.lane.b32.xlu0 %v562, 94
      %v569 = vpop.permute.xlu0 %568
      %570 = vrot.lane.b32.xlu0 %v563, 94
      %v571 = vpop.permute.xlu0 %570
      %572 = vrot.lane.b32.xlu0 %v564, 94
      %v573 = vpop.permute.xlu0 %572
      %vm574 = vcmask 769024
      %v575 = vsel %vm574, %v569, %v571
      %v576 = vsel %vm574, %v571, %v573
      %579 = vst [vmem:[#allocation3 + $0x80] sm:$0xff] %v575
      %580 = vst [vmem:[#allocation3 + $0x88] sm:$0xff] %v576
      %v581 = vld [vmem:[%s3] sm:$0xff]
      %v582 = vld [vmem:[%s3 + $0x8] sm:$0xff]
      %v583 = vld [vmem:[%s3 + $0x10] sm:$0xff]
      %v584 = vld [vmem:[%s3 + $0x18] sm:$0xff]
      %v585 = vld [vmem:[#allocation3] sm:$0xff]
      %v586 = vld [vmem:[#allocation3 + $0x8] sm:$0xff]
      %v587 = vld [vmem:[#allocation3 + $0x10] sm:$0xff]
      %v588 = vld [vmem:[#allocation3 + $0x18] sm:$0xff]
      %v589 = vld [vmem:[#allocation3 + $0x20] sm:$0xff]
      %v590 = vld [vmem:[#allocation3 + $0x28] sm:$0xff]
      %v591 = vld [vmem:[#allocation3 + $0x30] sm:$0xff]
      %v592 = vld [vmem:[#allocation3 + $0x38] sm:$0xff]
      %v593 = vld [vmem:[#allocation3 + $0x40] sm:$0xff]
      %v594 = vld [vmem:[#allocation3 + $0x48] sm:$0xff]
      %v595 = vld [vmem:[#allocation3 + $0x50] sm:$0xff]
      %v596 = vld [vmem:[#allocation3 + $0x58] sm:$0xff]
      %v597 = vld [vmem:[#allocation3 + $0x60] sm:$0xff]
      %v598 = vld [vmem:[#allocation3 + $0x68] sm:$0xff]
      %v599 = vld [vmem:[#allocation3 + $0x70] sm:$0xff]
      %v600 = vld [vmem:[#allocation3 + $0x78] sm:$0xff]
      %v601 = vld [vmem:[#allocation3 + $0x80] sm:$0xff]
      %v602 = vld [vmem:[#allocation3 + $0x88] sm:$0xff]
      %v607 = vunpack.c.l.b16 %v581
      %v608 = vunpack.c.h.b16 %v581
      %v609 = vunpack.c.l.b16 %v582
      %v610 = vunpack.c.h.b16 %v582
      %v611 = vunpack.c.l.b16 %v583
      %v612 = vunpack.c.h.b16 %v583
      %v613 = vunpack.c.l.b16 %v584
      %v614 = vunpack.c.h.b16 %v584
      %v615 = vpack.c.b16 %v609, %v607
      %v616 = vpack.c.b16 %v610, %v608
      %v617 = vpack.c.b16 %v613, %v611
      %v618 = vpack.c.b16 %v614, %v612
      %vm621 = vcmask 130048
      %v623 = vsel %vm621, %v616, 0
      %v626 = vsel %vm621, %v618, 0
      %628 = vmatprep.subr.bf16.mxu0 %v586
      %629 = vmatpush1.bf16.msra.mxu0 %v585
      %630 = vmatprep.subr.bf16.mxu0 %v588
      %631 = vmatpush1.bf16.msra.mxu0 %v587
      %632 = vmatprep.subr.bf16.mxu0 %v590
      %633 = vmatpush1.bf16.msra.mxu0 %v589
      %634 = vmatprep.subr.bf16.mxu0 %v592
      %635 = vmatpush1.bf16.msra.mxu0 %v591
      %636 = vmatprep.subr.bf16.mxu0 %v594
      %637 = vmatpush1.bf16.msra.mxu0 %v593
      %638 = vmatprep.subr.bf16.mxu0 %v596
      %639 = vmatpush1.bf16.msra.mxu0 %v595
      %640 = vmatprep.subr.bf16.mxu0 %v598
      %641 = vmatpush1.bf16.msra.mxu0 %v597
      %642 = vmatprep.subr.bf16.mxu0 %v600
      %643 = vmatpush1.bf16.msra.mxu0 %v599
      %644 = vmatprep.subr.bf16.mxu0 %v602
      %645 = vmatpush1.bf16.msra.mxu0 %v601
      %646 = vmatprep.subr.bf16.mxu0 0
      %647 = vmatpush1.bf16.msra.mxu0 0
      %648 = vmatprep.subr.bf16.mxu0 0
      %649 = vmatpush1.bf16.msra.mxu0 0
      %650 = vmatprep.subr.bf16.mxu0 0
      %651 = vmatpush1.bf16.msra.mxu0 0
      %652 = vmatprep.subr.bf16.mxu0 0
      %653 = vmatpush1.bf16.msra.mxu0 0
      %654 = vmatprep.subr.bf16.mxu0 0
      %655 = vmatpush1.bf16.msra.mxu0 0
      %656 = vmatprep.subr.bf16.mxu0 0
      %657 = vmatpush1.bf16.msra.mxu0 0
      %658 = vmatprep.subr.bf16.mxu0 0
      %659 = vmatpush1.bf16.msra.mxu0 0
      %660 = vmatprep.mubr.bf16.mxu0 %v623
      %661 = vmatmul.mubr.bf16.gmra.mrb[0].mxu0 %v615
      %v662 = vpop.f32.mrb[0].mxu0
      %v663 = vadd.f32 0.0, %v662
      %v664 = vpop.f32.mrb[0].mxu0
      %v665 = vadd.f32 0.0, %v664
      %v666 = vpop.f32.mrb[0].mxu0
      %v667 = vadd.f32 0.0, %v666
      %v668 = vpop.f32.mrb[0].mxu0
      %v669 = vadd.f32 0.0, %v668
      %670 = vmatprep.mubr.bf16.mxu0 %v626
      %671 = vmatmul.mubr.bf16.gmra.mrb[0].mxu0 %v617
      %v672 = vpop.f32.mrb[0].mxu0
      %v673 = vadd.f32 0.0, %v672
      %v674 = vpop.f32.mrb[0].mxu0
      %v675 = vadd.f32 0.0, %v674
      %v676 = vpop.f32.mrb[0].mxu0
      %v677 = vadd.f32 0.0, %v676
      %v678 = vpop.f32.mrb[0].mxu0
      %v679 = vadd.f32 0.0, %v678
      %680 = vdwg.mxu0
      %681 = vst [vmem:[%s269] sm:$0xff] %v663
      %682 = vst [vmem:[%s269 + $0x8] sm:$0xff] %v665
      %683 = vst [vmem:[%s269 + $0x10] sm:$0xff] %v667
      %684 = vst [vmem:[%s269 + $0x18] sm:$0xff] %v669
      %685 = vst [vmem:[%s269 + $0x20] sm:$0xff] %v673
      %686 = vst [vmem:[%s269 + $0x28] sm:$0xff] %v675
      %687 = vst [vmem:[%s269 + $0x30] sm:$0xff] %v677
      %688 = vst [vmem:[%s269 + $0x38] sm:$0xff] %v679
      %s689 = smul.u32 2, %s20
      %p690 = scmp.lt.s32.totalorder %s19, 1
      %s691 = scalar_select %p690, %s19, 1
      %p692 = scmp.lt.s32.totalorder %s689, 1
      %s693 = scalar_select %p692, %s689, 1
      %s694 = smul.addr %s691, 8
      %s695 = sadd.s32 %s693, %s694
      %s696 = smul.addr %s695, 8
      %s697 = scalar_lea.vmem %s4, %s696
      // Predicated region
      $region37: #{conv2d_cd.1} parent=35 // pred_check
        %p698 = pneg %p145
      $region38: #{conv2d_cd.1} parent=35 // pred_check_branch
        %700 = sbr.rel (%p698) target = $region40
      $region39: #{conv2d_cd.1} parent=35 // pred_region
        %s701 = smul.u32 2, %s20
      $region40: #{conv2d_cd.1} parent=35 // pred_fallthru
        _
    $region36: #{conv2d_cd.1} parent=5 // pred_fallthru
      _
    %p702 = scmp.le.s32.totalorder 2, %s10
    // Predicated region
    $region41: #{conv2d_cd.1} parent=5 // pred_check
      %p703 = pneg %p702
    $region42: #{conv2d_cd.1} parent=5 // pred_check_branch
      %705 = sbr.rel (%p703) target = $region44
    $region43: #{conv2d_cd.1} parent=5 // pred_region
      %s706 = ssub.s32 %s10, 2
      // Predicated region
      $region45: #{conv2d_cd.1} parent=43 // pred_check
        %p707 = pneg %p151
      $region46: #{conv2d_cd.1} parent=43 // pred_check_branch
        %709 = sbr.rel (%p707) target = $region48
      $region47: #{conv2d_cd.1} parent=43 // pred_region
        %s710 = smul.u32 2, %s22
        %p711 = scmp.lt.s32.totalorder %s21, 1
        %s712 = scalar_select %p711, %s21, 1
        %p713 = scmp.lt.s32.totalorder %s710, 1
        %s714 = scalar_select %p713, %s710, 1
        %s715 = smul.addr %s712, 8
        %s716 = sadd.s32 %s714, %s715
        %s717 = smul.addr %s716, 8
        %s718 = scalar_lea.vmem %s4, %s717
      $region48: #{conv2d_cd.1} parent=43 // pred_fallthru
        _
    $region44: #{conv2d_cd.1} parent=5 // pred_fallthru
      _
  $region6: #{conv2d_cd.1} parent=0 // loop_footer
    %s14 = sadd.s32 1, %s10
  $region7: #{conv2d_cd.1} parent=0 // loop_footer_branch
    %9 = sbr.rel target = $region3
  $region8: #{conv2d_cd.1} parent=0 // loop_exit
    _

</llo_original>
